<compile_context>
chip_gen: v5e
topology: v5e:2x2
jax: 0.10.0
libtpu: 0.0.40
codegen_flags: <defaults>
</compile_context>

<pallas_src>
import functools

import jax
import jax.numpy as jnp
from jax import lax
from jax.experimental import pallas as pl
from jax.experimental.pallas import tpu as pltpu

INPUT_SIZE = 4
HIDDEN_SIZE = 20
OUTPUT_SIZE = 3

# Batch-major path: the (tb, 4) input block lane-pads 4->128 => 512*tb bytes per
# buffer, double-buffered.  At tb=16K:
#   in  buffers: 2 * 8 MiB = 16 MiB
#   out buffers: 2 * 512 KiB = 1 MiB   ((3,tb) sublane-padded to 8)
#   hidden (20->24, tb) f32 temp ~ 1.5 MiB, transposed x slab ~ 0.5 MiB
# ~20 MiB total -> fits every generation (v5e/v6e 128 MiB, v7x 64 MiB physical)
# under the explicit 40 MiB limit below.
TB_BATCH_MAJOR = 16 * 1024
# Feature-major path: every block is lane-dense, buffers are tiny, so the tile
# can be much larger (amortizes per-step overhead to <10%).
TB_FEATURE_MAJOR = 64 * 1024
# Below this per-tile size the ~0.35 us per-step overhead dominates the
# ~28 B/elem of HBM traffic, so small batches are not split just for megacore.
MIN_SPLIT_TILE = 4 * 1024

VMEM_LIMIT_BYTES = 40 * 1024 * 1024


def _mlp_kernel(x_ref, w1_ref, b1_ref, w2_ref, b2_ref, o_ref, *, x_batch_major):
    w1 = w1_ref[...]          # (20, 4)   PyTorch (out, in) layout — no wrapper transpose
    b1 = b1_ref[...]          # (20, 1)   broadcasts along lanes
    w2 = w2_ref[...]          # (3, 20)
    b2 = b2_ref[...]          # (3, 1)

    if x_batch_major:
        # x_ref is (tb, 4): contract the feature dim of both operands,
        # i.e. h = w1 @ x.T -> (20, tb).  The narrow operand transpose is
        # handled in-kernel (MXU feed / XLU relayout) instead of a separate
        # wrapper-side HBM transpose pass over x.
        h = lax.dot_general(
            w1, x_ref[...],
            dimension_numbers=(((1,), (1,)), ((), ())),
            preferred_element_type=jnp.float32)
    else:
        # x_ref is (4, tb): already feature-major.
        h = jnp.dot(w1, x_ref[...], preferred_element_type=jnp.float32)

    # Layer 1 bias + ReLU, batch on lanes.
    h = jnp.maximum(h + b1, 0.0)                       # (20, tb)
    # Layer 2: (3, 20) @ (20, tb) -> (3, tb).  (Could be 20 unrolled VPU FMAs;
    # left on the MXU — low priority per review since the kernel is mem-bound.)
    y = jnp.dot(w2, h, preferred_element_type=jnp.float32) + b2
    o_ref[...] = y.astype(o_ref.dtype)


def _round_up(n, m):
    return ((n + m - 1) // m) * m


def _pick_tiling(batch, tb_max):
    """Pick (tile, n_tiles) for the batch axis.

    - batch > tb_max: tile at tb_max; a ragged final block is handled by
      Pallas (OOB output lanes dropped; garbage input rows only affect garbage
      output columns since batch is never a contracted dim).
    - big-but-fitting batches: split into >= 2 tiles (multiple of 128) so the
      'parallel' grid axis can be sharded across v7x's two TensorCores.
    - small batches: single full-extent block — no padding, no masking.
    """
    if batch > tb_max:
        return tb_max, pl.cdiv(batch, tb_max)
    if batch >= 2 * MIN_SPLIT_TILE and batch % 128 == 0:
        tile = max(MIN_SPLIT_TILE, _round_up(pl.cdiv(batch, 2), 128))
        return tile, pl.cdiv(batch, tile)
    return batch, 1


def _canon_params(w1, b1, w2, b2):
    w1c = jnp.asarray(w1, jnp.float32).reshape(HIDDEN_SIZE, INPUT_SIZE)
    b1c = jnp.asarray(b1, jnp.float32).reshape(HIDDEN_SIZE, 1)
    w2c = jnp.asarray(w2, jnp.float32).reshape(OUTPUT_SIZE, HIDDEN_SIZE)
    b2c = jnp.asarray(b2, jnp.float32).reshape(OUTPUT_SIZE, 1)
    return w1c, b1c, w2c, b2c


def _weight_specs():
    # Constant index_maps: weights/biases are DMA'd once and stay resident in
    # VMEM across all grid steps (never re-fetched).
    return [
        pl.BlockSpec((HIDDEN_SIZE, INPUT_SIZE), lambda i: (0, 0)),
        pl.BlockSpec((HIDDEN_SIZE, 1), lambda i: (0, 0)),
        pl.BlockSpec((OUTPUT_SIZE, HIDDEN_SIZE), lambda i: (0, 0)),
        pl.BlockSpec((OUTPUT_SIZE, 1), lambda i: (0, 0)),
    ]


_COMPILER_PARAMS = pltpu.CompilerParams(
    dimension_semantics=("parallel",),   # independent batch tiles (megacore on v7x)
    vmem_limit_bytes=VMEM_LIMIT_BYTES,   # v5e default scope is only 16 MiB
)


def ann_one_hid(x, w1, b1, w2, b2, *, tb_max=TB_BATCH_MAJOR):
    """Forward pass matching the PyTorch module API: (B, 4) -> (B, 3).

    x is consumed in its native batch-major layout (no wrapper transpose / pad
    pass); the kernel emits a feature-major (3, B) slab with lane-dense stores
    which is transposed back to (B, 3) here — the only remaining wrapper pass.
    """
    B = x.shape[0]
    assert x.shape == (B, INPUT_SIZE)
    tb, n_tiles = _pick_tiling(B, tb_max)
    w1c, b1c, w2c, b2c = _canon_params(w1, b1, w2, b2)

    y_fm = pl.pallas_call(
        functools.partial(_mlp_kernel, x_batch_major=True),
        out_shape=jax.ShapeDtypeStruct((OUTPUT_SIZE, B), jnp.float32),
        grid_spec=pl.GridSpec(
            grid=(n_tiles,),
            in_specs=[pl.BlockSpec((tb, INPUT_SIZE), lambda i: (i, 0))]
                     + _weight_specs(),
            out_specs=pl.BlockSpec((OUTPUT_SIZE, tb), lambda i: (0, i)),
        ),
        compiler_params=_COMPILER_PARAMS,
    )(x.astype(jnp.float32), w1c, b1c, w2c, b2c)

    return y_fm.T   # (B, 3)


def ann_one_hid_feature_major(x_fm, w1, b1, w2, b2, *, tb_max=TB_FEATURE_MAJOR):
    """Review's preferred entry point: feature-major activations end to end.

    x_fm : (4, B) -> (3, B) float32.  Zero wrapper-side HBM passes; all blocks
    are lane-dense so the batch tile can be much larger.
    """
    B = x_fm.shape[1]
    assert x_fm.shape == (INPUT_SIZE, B)
    tb, n_tiles = _pick_tiling(B, tb_max)
    w1c, b1c, w2c, b2c = _canon_params(w1, b1, w2, b2)

    return pl.pallas_call(
        functools.partial(_mlp_kernel, x_batch_major=False),
        out_shape=jax.ShapeDtypeStruct((OUTPUT_SIZE, B), jnp.float32),
        grid_spec=pl.GridSpec(
            grid=(n_tiles,),
            in_specs=[pl.BlockSpec((INPUT_SIZE, tb), lambda i: (0, i))]
                     + _weight_specs(),
            out_specs=pl.BlockSpec((OUTPUT_SIZE, tb), lambda i: (0, i)),
        ),
        compiler_params=_COMPILER_PARAMS,
    )(x_fm.astype(jnp.float32), w1c, b1c, w2c, b2c)


def _init_params(key):
    # Deterministic init mimicking nn.Linear defaults (uniform +/- 1/sqrt(fan_in)).
    k1, k2, k3, k4 = jax.random.split(key, 4)
    bound1 = 1.0 / (INPUT_SIZE ** 0.5)
    bound2 = 1.0 / (HIDDEN_SIZE ** 0.5)
    w1 = jax.random.uniform(k1, (HIDDEN_SIZE, INPUT_SIZE), jnp.float32, -bound1, bound1)
    b1 = jax.random.uniform(k2, (HIDDEN_SIZE,), jnp.float32, -bound1, bound1)
    w2 = jax.random.uniform(k3, (OUTPUT_SIZE, HIDDEN_SIZE), jnp.float32, -bound2, bound2)
    b2 = jax.random.uniform(k4, (OUTPUT_SIZE,), jnp.float32, -bound2, bound2)
    return w1, b1, w2, b2


def _reference(x, w1, b1, w2, b2):
    h = jnp.maximum(x @ w1.T + b1[None, :], 0.0)
    return h @ w2.T + b2[None, :]


if __name__ == "__main__":
    key = jax.random.PRNGKey(0)
    kx, kx2, kp = jax.random.split(key, 3)
    w1, b1, w2, b2 = _init_params(kp)

    # Small batch (module-spec shape): single full-extent block, zero padding.
    batch = 8
    x = jax.random.normal(kx, (batch, INPUT_SIZE), jnp.float32)
    y = ann_one_hid(x, w1, b1, w2, b2)
    jax.block_until_ready(y)
    y_ref = _reference(x, w1, b1, w2, b2)
    assert y.shape == (batch, OUTPUT_SIZE)
    assert jnp.allclose(y, y_ref, atol=1e-5, rtol=1e-5)

    # Feature-major fast path (review's preferred layout): same numbers.
    y_fm = ann_one_hid_feature_major(x.T, w1, b1, w2, b2)
    jax.block_until_ready(y_fm)
    assert y_fm.shape == (OUTPUT_SIZE, batch)
    assert jnp.allclose(y_fm.T, y_ref, atol=1e-5, rtol=1e-5)

    # Larger batch: exercises the multi-tile grid / resident-weight /
    # megacore-parallel path (2 tiles of TB_BATCH_MAJOR, exactly divisible).
    batch2 = 2 * TB_BATCH_MAJOR
    x2 = jax.random.normal(kx2, (batch2, INPUT_SIZE), jnp.float32)
    y2 = ann_one_hid(x2, w1, b1, w2, b2)
    jax.block_until_ready(y2)
    y2_ref = _reference(x2, w1, b1, w2, b2)
    assert y2.shape == (batch2, OUTPUT_SIZE)
    assert jnp.allclose(y2, y2_ref, atol=1e-5, rtol=1e-5)

    print("KERNEL_OK")
</pallas_src>

<mosaic_0001>
module attributes {stable_mosaic.version = 11 : i64} {
  func.func @_mlp_kernel(%arg0: i32, %arg1: memref<8x4xf32, #tpu.memory_space<vmem>>, %arg2: memref<20x4xf32, #tpu.memory_space<vmem>>, %arg3: memref<20x1xf32, #tpu.memory_space<vmem>>, %arg4: memref<3x20xf32, #tpu.memory_space<vmem>>, %arg5: memref<3x1xf32, #tpu.memory_space<vmem>>, %arg6: memref<3x8xf32, #tpu.memory_space<vmem>>) attributes {dimension_semantics = [#tpu.dimension_semantics<parallel>], iteration_bounds = array<i64: 1>, scalar_prefetch = 0 : i64, scratch_operands = 0 : i64, tpu.core_type = #tpu.core_type<tc>, window_params = [{transform_indices = @transform_0, window_bounds = array<i64: 8, 4>}, {pipeline_mode = #tpu.pipeline_mode<synchronous>, transform_indices = @transform_1, window_bounds = array<i64: 20, 4>}, {pipeline_mode = #tpu.pipeline_mode<synchronous>, transform_indices = @transform_2, window_bounds = array<i64: 20, 1>}, {pipeline_mode = #tpu.pipeline_mode<synchronous>, transform_indices = @transform_3, window_bounds = array<i64: 3, 20>}, {pipeline_mode = #tpu.pipeline_mode<synchronous>, transform_indices = @transform_4, window_bounds = array<i64: 3, 1>}, {transform_indices = @transform_5, window_bounds = array<i64: 3, 8>}]} {
    %c0 = arith.constant 0 : index
    %c0_0 = arith.constant 0 : index
    %0 = vector.load %arg2[%c0, %c0_0] : memref<20x4xf32, #tpu.memory_space<vmem>>, vector<20x4xf32>
    %c0_1 = arith.constant 0 : index
    %c0_2 = arith.constant 0 : index
    %1 = vector.load %arg3[%c0_1, %c0_2] : memref<20x1xf32, #tpu.memory_space<vmem>>, vector<20x1xf32>
    %c0_3 = arith.constant 0 : index
    %c0_4 = arith.constant 0 : index
    %2 = vector.load %arg4[%c0_3, %c0_4] : memref<3x20xf32, #tpu.memory_space<vmem>>, vector<3x20xf32>
    %c0_5 = arith.constant 0 : index
    %c0_6 = arith.constant 0 : index
    %3 = vector.load %arg5[%c0_5, %c0_6] : memref<3x1xf32, #tpu.memory_space<vmem>>, vector<3x1xf32>
    %c0_7 = arith.constant 0 : index
    %c0_8 = arith.constant 0 : index
    %4 = vector.load %arg1[%c0_7, %c0_8] : memref<8x4xf32, #tpu.memory_space<vmem>>, vector<8x4xf32>
    %cst = arith.constant dense<0.000000e+00> : vector<20x8xf32>
    %5 = tpu.matmul %0, %4, %cst {dimension_numbers = #tpu.dot_dimension_numbers<[1], [1], [0], [0], [0, 0, 1, 0], [], []>} : vector<20x4xf32>, vector<8x4xf32>, vector<20x8xf32> -> vector<20x8xf32>
    %6 = vector.broadcast %1 : vector<20x1xf32> to vector<20x8xf32>
    %7 = arith.addf %5, %6 : vector<20x8xf32>
    %cst_9 = arith.constant 0.000000e+00 : f32
    %8 = vector.broadcast %cst_9 : f32 to vector<20x8xf32>
    %9 = arith.maximumf %7, %8 : vector<20x8xf32>
    %cst_10 = arith.constant dense<0.000000e+00> : vector<3x8xf32>
    %10 = tpu.matmul %2, %9, %cst_10 {dimension_numbers = #tpu.dot_dimension_numbers<[1], [0], [0], [1], [0, 0, 1, 1], [], []>} : vector<3x20xf32>, vector<20x8xf32>, vector<3x8xf32> -> vector<3x8xf32>
    %11 = vector.broadcast %3 : vector<3x1xf32> to vector<3x8xf32>
    %12 = arith.addf %10, %11 : vector<3x8xf32>
    %c0_11 = arith.constant 0 : index
    %c0_12 = arith.constant 0 : index
    %13 = vector.load %arg6[%c0_11, %c0_12] : memref<3x8xf32, #tpu.memory_space<vmem>>, vector<3x8xf32>
    tpu.vector_store %arg6[%c0_11, %c0_12], %12 {strides = array<i32>} : memref<3x8xf32, #tpu.memory_space<vmem>>, vector<3x8xf32>,
    return
  }
  func.func @transform_0(%arg0: i32) -> (i32, i32) {
    %c0_i32 = arith.constant 0 : i32
    %c0_i32_0 = arith.constant 0 : i32
    return %arg0, %c0_i32 : i32, i32
  }
  func.func @transform_1(%arg0: i32) -> (i32, i32) {
    %c0_i32 = arith.constant 0 : i32
    %c0_i32_0 = arith.constant 0 : i32
    %c0_i32_1 = arith.constant 0 : i32
    return %c0_i32, %c0_i32_0 : i32, i32
  }
  func.func @transform_2(%arg0: i32) -> (i32, i32) {
    %c0_i32 = arith.constant 0 : i32
    %c0_i32_0 = arith.constant 0 : i32
    %c0_i32_1 = arith.constant 0 : i32
    return %c0_i32, %c0_i32_0 : i32, i32
  }
  func.func @transform_3(%arg0: i32) -> (i32, i32) {
    %c0_i32 = arith.constant 0 : i32
    %c0_i32_0 = arith.constant 0 : i32
    %c0_i32_1 = arith.constant 0 : i32
    return %c0_i32, %c0_i32_0 : i32, i32
  }
  func.func @transform_4(%arg0: i32) -> (i32, i32) {
    %c0_i32 = arith.constant 0 : i32
    %c0_i32_0 = arith.constant 0 : i32
    %c0_i32_1 = arith.constant 0 : i32
    return %c0_i32, %c0_i32_0 : i32, i32
  }
  func.func @transform_5(%arg0: i32) -> (i32, i32) {
    %c0_i32 = arith.constant 0 : i32
    %c0_i32_0 = arith.constant 0 : i32
    return %c0_i32, %arg0 : i32, i32
  }
}

</mosaic_0001>

<llo_original>
// kernel: tpu_custom_call.1
$region0: #{tpu_custom_call.1}
  #allocation0 [shape = 'u32[]', space=smem, size = 0x4, offset = 0x4, fixed_abs, tag = 'smem constant byte address 0x4 - core index']
  #allocation1 [shape = 'u32[72,128]{1,0:T(1,128)}', space=vmem, size = 0x9000, scoped, tag = 'internal scratch']
  %s0 = inlined_call_operand.vmem [shape: f32[8,4], index: 0, kind: input, shape index: {}]
  %s1 = inlined_call_operand.vmem [shape: f32[20,4], index: 1, kind: input, shape index: {}]
  %s2 = inlined_call_operand.vmem [shape: f32[20,1], index: 2, kind: input, shape index: {}]
  %s3 = inlined_call_operand.vmem [shape: f32[3,20], index: 3, kind: input, shape index: {}]
  %s4 = inlined_call_operand.vmem [shape: f32[3,1], index: 4, kind: input, shape index: {}]
  %s5 = inlined_call_operand.hbm [shape: f32[3,8], index: 5, kind: output, shape index: {}]
  %s6 = sld [smem:[#allocation0]]
  $region30: #{tpu_custom_call.1} parent=0
    _
  %s8 = ssub.s32 1, %s6
  %s9 = scalar_select 0, %s8, %s6
  $region1: #{tpu_custom_call.1} parent=0
    #allocation2 [shape = 'u8[2048]{0}', space=vmem, size = 0x800, scoped, tag = 'output window, operand 0, single buffered']
    #allocation3 [shape = 's32[1]{0}', space=sflag, size = 0x4, scoped, tag = 'scoped memory for tpu_custom_call.1']
    %10 = vsyncpa [#allocation3], 0
    // Predicated region
    $region2: #{tpu_custom_call.1} parent=1 // pred_check
      _
    $region3: #{tpu_custom_call.1} parent=1 // pred_check_branch
      %12 = sbr.rel (0) target = $region5
    $region4: #{tpu_custom_call.1} parent=1 // pred_region
      _
    $region5: #{tpu_custom_call.1} parent=1 // pred_fallthru
      _
    // Predicated region
    $region6: #{tpu_custom_call.1} parent=1 // pred_check
      _
    $region7: #{tpu_custom_call.1} parent=1 // pred_check_branch
      %14 = sbr.rel (0) target = $region9
    $region8: #{tpu_custom_call.1} parent=1 // pred_region
      _
    $region9: #{tpu_custom_call.1} parent=1 // pred_fallthru
      _
    // Predicated region
    $region10: #{tpu_custom_call.1} parent=1 // pred_check
      _
    $region11: #{tpu_custom_call.1} parent=1 // pred_check_branch
      %16 = sbr.rel (0) target = $region13
    $region12: #{tpu_custom_call.1} parent=1 // pred_region
      _
    $region13: #{tpu_custom_call.1} parent=1 // pred_fallthru
      _
    // Predicated region
    $region14: #{tpu_custom_call.1} parent=1 // pred_check
      _
    $region15: #{tpu_custom_call.1} parent=1 // pred_check_branch
      %18 = sbr.rel (0) target = $region17
    $region16: #{tpu_custom_call.1} parent=1 // pred_region
      _
    $region17: #{tpu_custom_call.1} parent=1 // pred_fallthru
      _
    // Predicated region
    $region18: #{tpu_custom_call.1} parent=1 // pred_check
      _
    $region19: #{tpu_custom_call.1} parent=1 // pred_check_branch
      %20 = sbr.rel (0) target = $region21
    $region20: #{tpu_custom_call.1} parent=1 // pred_region
      _
    $region21: #{tpu_custom_call.1} parent=1 // pred_fallthru
      _
    %v21 = vld [vmem:[%s1] sm:$0xff]
    %v22 = vld [vmem:[%s1 + $0x8] sm:$0xff]
    %v23 = vld [vmem:[%s1 + $0x10] sm:$0xf]
    %v24 = vld [vmem:[%s2] sm:$0xff]
    %v25 = vld [vmem:[%s2 + $0x8] sm:$0xff]
    %v26 = vld [vmem:[%s2 + $0x10] sm:$0xf]
    %v27 = vld [vmem:[%s3] sm:$0x7]
    %v28 = vld [vmem:[%s4] sm:$0x7]
    %v29 = vld [vmem:[%s0] sm:$0xff]
    %31 = vset.pattern.permute.xlu0 0
    %32 = vperm.xlu0 %31, %v24
    %v33 = vpop.permute.xlu0 %32
    %36 = vset.pattern.permute.xlu0 0
    %37 = vperm.xlu0 %36, %v25
    %v38 = vpop.permute.xlu0 %37
    %41 = vset.pattern.permute.xlu0 0
    %42 = vperm.xlu0 %41, %v26
    %v43 = vpop.permute.xlu0 %42
    %vm45 = vcmask 31744
    %v47 = vsel %vm45, %v21, 0
    %v50 = vsel %vm45, %v22, 0
    %v53 = vsel %vm45, %v23, 0
    %v56 = vsel %vm45, %v29, 0
    %58 = vmatpush.xpose.msra.mxu0 0.0
    %59 = vmatpush.xpose.msra.mxu0 0.0
    %60 = vmatpush.xpose.msra.mxu0 0.0
    %61 = vmatpush.xpose.msra.mxu0 0.0
    %62 = vmatpush.xpose.msra.mxu0 0.0
    %63 = vmatpush.xpose.msra.mxu0 0.0
    %64 = vmatpush.xpose.msra.mxu0 0.0
    %65 = vmatpush.xpose.msra.mxu0 0.0
    %66 = vmatpush.xpose.msra.mxu0 0.0
    %67 = vmatpush.xpose.msra.mxu0 0.0
    %68 = vmatpush.xpose.msra.mxu0 0.0
    %69 = vmatpush.xpose.msra.mxu0 0.0
    %70 = vmatpush.xpose.msra.mxu0 0.0
    %71 = vmatpush.xpose.msra.mxu0 0.0
    %72 = vmatpush.xpose.msra.mxu0 0.0
    %73 = vmatpush.xpose.msra.mxu0 %v56
    %74 = vmatmul.f32.gmra.mxu0 %v47
    %v75 = vpop.f32.mrf.mxu0
    %v76 = vadd.f32 %v33, %v75
    %77 = vmatmul.f32.gmra.mxu0 %v50
    %v78 = vpop.f32.mrf.mxu0
    %v79 = vadd.f32 %v38, %v78
    %80 = vmatmul.f32.gmra.mxu0 %v53
    %v81 = vpop.f32.mrf.mxu0
    %v82 = vadd.f32 %v43, %v81
    %83 = vdwg.mxu0
    %v84 = vmax.f32 %v76, 0.0
    %v85 = vmax.f32 %v79, 0.0
    %v86 = vmax.f32 %v82, 0.0
    %88 = vset.pattern.permute.xlu0 0
    %89 = vperm.xlu0 %88, %v28
    %v90 = vpop.permute.xlu0 %89
    %vm92 = vcmask 162816
    %v94 = vsel %vm92, %v27, 0
    %vm96 = vcmask 1043456
    %v98 = vsel %vm96, %v86, 0
    %100 = vmatpush.msra.mxu0 0.0
    %101 = vmatpush.msra.mxu0 0.0
    %102 = vmatpush.msra.mxu0 0.0
    %103 = vmatpush.msra.mxu0 0.0
    %104 = vmatpush.msra.mxu0 0.0
    %105 = vmatpush.msra.mxu0 0.0
    %106 = vmatpush.msra.mxu0 0.0
    %107 = vmatpush.msra.mxu0 0.0
    %108 = vmatpush.msra.mxu0 0.0
    %109 = vmatpush.msra.mxu0 0.0
    %110 = vmatpush.msra.mxu0 0.0
    %111 = vmatpush.msra.mxu0 0.0
    %112 = vmatpush.msra.mxu0 0.0
    %113 = vmatpush.msra.mxu0 %v98
    %114 = vmatpush.msra.mxu0 %v85
    %115 = vmatpush.msra.mxu0 %v84
    %116 = vmatmul.f32.gmra.mxu0 %v94
    %v117 = vpop.f32.mrf.mxu0
    %v118 = vadd.f32 %v90, %v117
    %119 = vdwg.mxu0
    %vm120 = vcmask 59392
    %121 = vst.msk [vmem:[#allocation2] sm:$0x7] %vm120, %v118
    // Predicated region
    $region22: #{tpu_custom_call.1} parent=1 // pred_check
      _
    $region23: #{tpu_custom_call.1} parent=1 // pred_check_branch
      %123 = sbr.rel (0) target = $region25
    $region24: #{tpu_custom_call.1} parent=1 // pred_region
      %125 = vsyncadd [#allocation3], 0
      %s127 = sshll.u32 [#allocation2], 4
      %s128 = int_to_ptr.vmem [resolvable:$true] %s127
      %s129 = sshll.u32 %s5, 4
      %s130 = int_to_ptr.hbm [resolvable:$true] %s129
      %132 = dma.vmem_to_hbm [thread:$0]  %s128, 64, %s130, [#allocation3]
    $region25: #{tpu_custom_call.1} parent=1 // pred_fallthru
      _
    // Predicated region
    $region26: #{tpu_custom_call.1} parent=1 // pred_check
      _
    $region27: #{tpu_custom_call.1} parent=1 // pred_check_branch
      %134 = sbr.rel (0) target = $region29
    $region28: #{tpu_custom_call.1} parent=1 // pred_region
      %136 = dma.done [#allocation3], 64
    $region29: #{tpu_custom_call.1} parent=1 // pred_fallthru
      _
    %137 = vsyncpa [#allocation3], 1

</llo_original>
